<compile_context>
chip_gen: v5e
topology: v5e:2x2
jax: 0.10.0
libtpu: 0.0.40
codegen_flags: <defaults>
</compile_context>

<pallas_src>
import functools

import jax
import jax.numpy as jnp
from jax.experimental import pallas as pl
from jax.experimental.pallas import tpu as pltpu

P_DROP = 0.1
KEEP_SCALE = 1.0 / (1.0 - P_DROP)
# Drop iff 31-bit hash value < P_DROP * 2^31  (signed compare, safe everywhere).
DROP_THRESHOLD_31 = int(P_DROP * (2 ** 31))


def _hash_u32(u):
    """lowbias32 integer mixer (Chris Wellons); uint32 in -> uint32 out."""
    u = u ^ (u >> jnp.uint32(16))
    u = u * jnp.uint32(0x7FEB352D)
    u = u ^ (u >> jnp.uint32(15))
    u = u * jnp.uint32(0x846CA68B)
    u = u ^ (u >> jnp.uint32(16))
    return u


def dropout_kernel(seed_ref, x_ref, o_ref, *, tile_rows, hidden):
    # Global element index of every entry of this tile.
    row_off = pl.program_id(0) * tile_rows
    rows = jax.lax.broadcasted_iota(jnp.int32, (tile_rows, hidden), 0)
    cols = jax.lax.broadcasted_iota(jnp.int32, (tile_rows, hidden), 1)
    gidx = (row_off + rows) * hidden + cols                     # < 2^31 for this size

    # Mix seed + global index through a counter-based hash -> 31 random bits.
    seed_u = seed_ref[0].astype(jnp.uint32) * jnp.uint32(0x9E3779B9)
    bits = _hash_u32(gidx.astype(jnp.uint32) + seed_u)
    bits31 = (bits >> jnp.uint32(1)).astype(jnp.int32)          # in [0, 2^31)

    # Fused mask-multiply: keep -> 1/(1-p), drop -> 0.
    keep = (bits31 >= jnp.int32(DROP_THRESHOLD_31)).astype(x_ref.dtype)
    o_ref[...] = x_ref[...] * (keep * jnp.asarray(KEEP_SCALE, dtype=x_ref.dtype))


def _pick_tile_rows(bs):
    # Prefer >= 2 tiles (even counts first) so the pipeline can double-buffer;
    # rows must stay a multiple of 8 (sublane tiling).
    for tm in (96, 64, 128, 32, 16, 8):
        if bs % tm == 0 and bs // tm >= 2:
            return tm
    return bs


@jax.jit
def dropout_pallas(x, seed):
    B, S, H = x.shape
    BS = B * S
    x2d = x.reshape(BS, H)
    tm = _pick_tile_rows(BS)
    n_tiles = BS // tm
    n_elem = BS * H

    kernel = functools.partial(dropout_kernel, tile_rows=tm, hidden=H)
    out2d = pl.pallas_call(
        kernel,
        out_shape=jax.ShapeDtypeStruct((BS, H), x.dtype),
        grid_spec=pltpu.PrefetchScalarGridSpec(
            num_scalar_prefetch=1,                      # seed lands in SMEM
            grid=(n_tiles,),
            in_specs=[pl.BlockSpec((tm, H), lambda i, seed: (i, 0))],
            out_specs=pl.BlockSpec((tm, H), lambda i, seed: (i, 0)),
        ),
        compiler_params=pltpu.CompilerParams(
            dimension_semantics=("parallel",)),
        cost_estimate=pl.CostEstimate(
            flops=3 * n_elem,
            transcendentals=0,
            bytes_accessed=2 * n_elem * x.dtype.itemsize),
    )(seed, x2d)
    return out2d.reshape(B, S, H)


if __name__ == "__main__":
    key = jax.random.PRNGKey(0)
    # Matches the module's input: torch.randn([1, 384, 768])
    x = jax.random.normal(key, (1, 384, 768), dtype=jnp.float32)
    seed = jnp.array([0], dtype=jnp.int32)

    out = dropout_pallas(x, seed)
    out = jax.block_until_ready(out)

    # Sanity checks on dropout semantics.
    assert out.shape == x.shape and out.dtype == x.dtype
    nonzero = out != 0.0
    # Non-dropped elements must equal x * 1/(1-p).
    assert bool(jnp.allclose(jnp.where(nonzero, out, 0.0),
                             jnp.where(nonzero, x * KEEP_SCALE, 0.0),
                             rtol=1e-6, atol=1e-6))
    # Dropout rate should be roughly p (loose bound; p=0.1).
    zero_frac = float(jnp.mean(jnp.logical_not(nonzero)))
    assert 0.02 < zero_frac < 0.25, f"unexpected drop fraction {zero_frac}"
    # Different seeds must give different masks.
    out2 = jax.block_until_ready(dropout_pallas(x, jnp.array([7], dtype=jnp.int32)))
    assert bool(jnp.any((out == 0.0) != (out2 == 0.0)))

    print("KERNEL_OK")
</pallas_src>

<mosaic_0001>
module attributes {stable_mosaic.version = 11 : i64} {
  func.func @dropout_kernel(%arg0: i32, %arg1: memref<1xi32, #tpu.memory_space<smem>>, %arg2: memref<96x768xf32, #tpu.memory_space<vmem>>, %arg3: memref<96x768xf32, #tpu.memory_space<vmem>>) attributes {dimension_semantics = [#tpu.dimension_semantics<parallel>], iteration_bounds = array<i64: 4>, scalar_prefetch = 1 : i64, scratch_operands = 0 : i64, tpu.core_type = #tpu.core_type<tc>, window_params = [{transform_indices = @transform_0, window_bounds = array<i64: 96, 768>}, {transform_indices = @transform_1, window_bounds = array<i64: 96, 768>}]} {
    %c96_i32 = arith.constant 96 : i32
    %0 = arith.muli %arg0, %c96_i32 : i32
    %1 = tpu.iota {dimensions = array<i32: 0>} : vector<96x768xi32>
    %2 = tpu.iota {dimensions = array<i32: 1>} : vector<96x768xi32>
    %3 = vector.broadcast %0 : i32 to vector<96x768xi32>
    %4 = arith.addi %3, %1 : vector<96x768xi32>
    %c768_i32 = arith.constant 768 : i32
    %5 = vector.broadcast %c768_i32 : i32 to vector<96x768xi32>
    %6 = arith.muli %4, %5 : vector<96x768xi32>
    %7 = arith.addi %6, %2 : vector<96x768xi32>
    %c0 = arith.constant 0 : index
    %8 = memref.load %arg1[%c0] : memref<1xi32, #tpu.memory_space<smem>>
    %c-1640531527_i32 = arith.constant -1640531527 : i32
    %9 = arith.muli %8, %c-1640531527_i32 : i32
    %10 = vector.broadcast %9 : i32 to vector<96x768xi32>
    %11 = arith.addi %7, %10 : vector<96x768xi32>
    %c16_i32 = arith.constant 16 : i32
    %12 = vector.broadcast %c16_i32 : i32 to vector<96x768xi32>
    %13 = arith.shrui %11, %12 : vector<96x768xi32>
    %14 = arith.xori %11, %13 : vector<96x768xi32>
    %c2146121005_i32 = arith.constant 2146121005 : i32
    %15 = vector.broadcast %c2146121005_i32 : i32 to vector<96x768xi32>
    %16 = arith.muli %14, %15 : vector<96x768xi32>
    %c15_i32 = arith.constant 15 : i32
    %17 = vector.broadcast %c15_i32 : i32 to vector<96x768xi32>
    %18 = arith.shrui %16, %17 : vector<96x768xi32>
    %19 = arith.xori %16, %18 : vector<96x768xi32>
    %c-2073254261_i32 = arith.constant -2073254261 : i32
    %20 = vector.broadcast %c-2073254261_i32 : i32 to vector<96x768xi32>
    %21 = arith.muli %19, %20 : vector<96x768xi32>
    %c16_i32_0 = arith.constant 16 : i32
    %22 = vector.broadcast %c16_i32_0 : i32 to vector<96x768xi32>
    %23 = arith.shrui %21, %22 : vector<96x768xi32>
    %24 = arith.xori %21, %23 : vector<96x768xi32>
    %c1_i32 = arith.constant 1 : i32
    %25 = vector.broadcast %c1_i32 : i32 to vector<96x768xi32>
    %26 = arith.shrui %24, %25 : vector<96x768xi32>
    %c214748364_i32 = arith.constant 214748364 : i32
    %27 = vector.broadcast %c214748364_i32 : i32 to vector<96x768xi32>
    %28 = arith.cmpi sge, %26, %27 : vector<96x768xi32>
    %29 = arith.extui %28 : vector<96x768xi1> to vector<96x768xi32>
    %30 = arith.sitofp %29 : vector<96x768xi32> to vector<96x768xf32>
    %c0_1 = arith.constant 0 : index
    %c0_2 = arith.constant 0 : index
    %31 = vector.load %arg2[%c0_1, %c0_2] : memref<96x768xf32, #tpu.memory_space<vmem>>, vector<96x768xf32>
    %cst = arith.constant 1.11111116 : f32
    %32 = vector.broadcast %cst : f32 to vector<96x768xf32>
    %33 = arith.mulf %30, %32 : vector<96x768xf32>
    %34 = arith.mulf %31, %33 : vector<96x768xf32>
    %c0_3 = arith.constant 0 : index
    %c0_4 = arith.constant 0 : index
    %35 = vector.load %arg3[%c0_3, %c0_4] : memref<96x768xf32, #tpu.memory_space<vmem>>, vector<96x768xf32>
    tpu.vector_store %arg3[%c0_3, %c0_4], %34 {strides = array<i32>} : memref<96x768xf32, #tpu.memory_space<vmem>>, vector<96x768xf32>,
    return
  }
  func.func @transform_0(%arg0: i32, %arg1: memref<1xi32, #tpu.memory_space<smem>>) -> (i32, i32) {
    %c0_i32 = arith.constant 0 : i32
    %c0_i32_0 = arith.constant 0 : i32
    return %arg0, %c0_i32 : i32, i32
  }
  func.func @transform_1(%arg0: i32, %arg1: memref<1xi32, #tpu.memory_space<smem>>) -> (i32, i32) {
    %c0_i32 = arith.constant 0 : i32
    %c0_i32_0 = arith.constant 0 : i32
    return %arg0, %c0_i32 : i32, i32
  }
}

</mosaic_0001>

<llo_original>
// kernel: dropout_pallas.1
$region0: #{dropout_pallas.1}
  #allocation0 [shape = 'u32[]', space=smem, size = 0x4, offset = 0x4, fixed_abs, tag = 'smem constant byte address 0x4 - core index']
  #allocation1 [shape = 'u32[72,128]{1,0:T(1,128)}', space=vmem, size = 0x9000, scoped, tag = 'internal scratch']
  #allocation2 [shape = 's32[1]{0}', space=sflag, size = 0x4, scoped, tag = 'scoped memory for dropout_pallas.1']
  #allocation3 [shape = 's32[1]{0:T(128)S(6)}', space=smem, size = 0x200, scoped, tag = 'prefetched SMEM operand 0']
  %s0 = inlined_call_operand.<no memory space> [shape: s32[1], index: 0, kind: input, shape index: {}]
  %s1 = inlined_call_operand.hbm [shape: f32[384,768], index: 1, kind: input, shape index: {}]
  %s2 = inlined_call_operand.hbm [shape: f32[384,768], index: 2, kind: output, shape index: {}]
  %s3 = sld [smem:[#allocation0]]
  $region41: #{dropout_pallas.1} parent=0
    _
  %s5 = ssub.s32 1, %s3
  %s6 = scalar_select 0, %s5, %s3
  %7 = sst [smem:[#allocation3]] %s0
  $region1: #{dropout_pallas.1} parent=0
    #allocation4 [shape = 'u8[589824]{0}', space=vmem, size = 0x90000, scoped, tag = 'input window, operand 1']
    #allocation5 [shape = 's32[2]{0}', space=sflag, size = 0x8, scoped, tag = 'scoped memory for dropout_pallas.1']
    #allocation6 [shape = 's32[2]{0}', space=sflag, size = 0x8, scoped, tag = 'scoped memory for dropout_pallas.1']
    #allocation7 [shape = 'u8[589824]{0}', space=vmem, size = 0x90000, scoped, tag = 'output window, operand 0']
    %8 = vsyncpa [#allocation5], 0
    %s9 = scalar_lea.sflag [#allocation5], 1
    %10 = vsyncpa %s9, 0
    %11 = vsyncpa [#allocation6], 0
    %s12 = scalar_lea.sflag [#allocation6], 1
    %13 = vsyncpa %s12, 0
    loop: start=0, step=1, limit=6
    $region2: #{dropout_pallas.1} parent=1 // loop_pre_header
      _
    $region3: #{dropout_pallas.1} parent=1 // loop_header
      %s15 = sphi 0, %s19
      %p16 = scmp.ge.s32.totalorder %s15, 6
      %s25 = sphi 0, %s27
      %s28 = sphi 0, %s25
      %s29 = sphi 0, %s28
      %s45 = sphi 0, %s29
      %s51 = sphi 0, %s53
      %s54 = sphi 0, %s51
      %s55 = sphi 0, %s54
      %s71 = sphi 0, %s55
    $region4: #{dropout_pallas.1} parent=1 // loop_header_branch
      %18 = sbr.rel (%p16) target = $region8
    $region5: #{dropout_pallas.1} parent=1 // loop_body
      %s20 = ssub.s32 %s15, 1
      %s21 = ssub.s32 %s15, 2
      %s22 = sadd.s32 %s15, 1
      %s23 = ssub.s32 %s15, %s22
      %p24 = scmp.eq.s32.totalorder %s23, 0
      %s26 = sadd.s32 %s25, 1
      %s27 = scalar_select %p24, %s25, %s26
      %p30 = pneg %p24
      %p31 = scmp.eq.s32.totalorder %s15, 3
      %p32 = por %p30, %p31
      %p33 = scmp.ne.s32.totalorder %s25, %s28
      %p34 = scmp.eq.s32.totalorder %s15, 0
      %p35 = por %p33, %p34
      %p36 = scmp.ne.s32.totalorder %s25, %s28
      %p37 = scmp.eq.s32.totalorder %s20, 3
      %p38 = por %p36, %p37
      %p39 = scmp.ne.s32.totalorder %s28, %s29
      %p40 = scmp.eq.s32.totalorder %s20, 0
      %p41 = por %p39, %p40
      %p42 = scmp.ne.s32.totalorder %s28, %s29
      %p43 = scmp.eq.s32.totalorder %s21, 3
      %p44 = por %p42, %p43
      %p46 = scmp.ne.s32.totalorder %s29, %s45
      %p47 = scmp.eq.s32.totalorder %s21, 0
      %p48 = por %p46, %p47
      %s49 = ssub.s32 %s15, %s22
      %p50 = scmp.eq.s32.totalorder %s49, 0
      %s52 = sadd.s32 %s51, 1
      %s53 = scalar_select %p50, %s51, %s52
      %p56 = pneg %p50
      %p57 = scmp.eq.s32.totalorder %s15, 3
      %p58 = por %p56, %p57
      %p59 = scmp.ne.s32.totalorder %s51, %s54
      %p60 = scmp.eq.s32.totalorder %s15, 0
      %p61 = por %p59, %p60
      %p62 = scmp.ne.s32.totalorder %s51, %s54
      %p63 = scmp.eq.s32.totalorder %s20, 3
      %p64 = por %p62, %p63
      %p65 = scmp.ne.s32.totalorder %s54, %s55
      %p66 = scmp.eq.s32.totalorder %s20, 0
      %p67 = por %p65, %p66
      %p68 = scmp.ne.s32.totalorder %s54, %s55
      %p69 = scmp.eq.s32.totalorder %s21, 3
      %p70 = por %p68, %p69
      %p72 = scmp.ne.s32.totalorder %s55, %s71
      %p73 = scmp.eq.s32.totalorder %s21, 0
      %p74 = por %p72, %p73
      %p75 = scmp.le.s32.totalorder 1, %s15
      %p76 = scmp.lt.s32.totalorder %s15, 5
      %p77 = pnand %p75, %p76
      %p78 = pneg %p77
      // Predicated region
      $region9: #{dropout_pallas.1} parent=5 // pred_check
        _
      $region10: #{dropout_pallas.1} parent=5 // pred_check_branch
        %80 = sbr.rel (%p77) target = $region12
      $region11: #{dropout_pallas.1} parent=5 // pred_region
        %s81 = ssub.s32 %s15, 1
      $region12: #{dropout_pallas.1} parent=5 // pred_fallthru
        _
      %p82 = scmp.lt.s32.totalorder %s15, 4
      // Predicated region
      $region13: #{dropout_pallas.1} parent=5 // pred_check
        %p83 = pneg %p82
      $region14: #{dropout_pallas.1} parent=5 // pred_check_branch
        %85 = sbr.rel (%p83) target = $region16
      $region15: #{dropout_pallas.1} parent=5 // pred_region
        // Predicated region
        $region17: #{dropout_pallas.1} parent=15 // pred_check
          %p86 = pneg %p35
        $region18: #{dropout_pallas.1} parent=15 // pred_check_branch
          %88 = sbr.rel (%p86) target = $region20
        $region19: #{dropout_pallas.1} parent=15 // pred_region
          %s89 = sand.u32 %s25, 1
          %s90 = scalar_lea.sflag [#allocation5], %s89
          %s91 = sand.u32 %s25, 1
          %s92 = smul.addr %s91, 576
          %s93 = scalar_lea.vmem [#allocation4], %s92
          %s94 = smul.u32 12, %s15
          %96 = vsyncadd %s90, 0
          %s97 = smul.addr %s94, 6
          %s98 = smul.addr %s97, 8
          %s99 = scalar_lea.hbm %s1, %s98
          %s100 = sshll.u32 %s99, 4
          %s101 = int_to_ptr.hbm [resolvable:$true] %s100
          %s102 = sshll.u32 %s93, 4
          %s103 = int_to_ptr.vmem [resolvable:$true] %s102
          %108 = dma.hbm_to_vmem [thread:$0]  %s101, 9216, %s103, %s90, 768, 768, 48
        $region20: #{dropout_pallas.1} parent=15 // pred_fallthru
          _
      $region16: #{dropout_pallas.1} parent=5 // pred_fallthru
        _
      %p109 = scmp.le.s32.totalorder 1, %s15
      %p110 = scmp.lt.s32.totalorder %s15, 5
      %p111 = pnand %p109, %p110
      %p112 = pneg %p111
      // Predicated region
      $region21: #{dropout_pallas.1} parent=5 // pred_check
        _
      $region22: #{dropout_pallas.1} parent=5 // pred_check_branch
        %114 = sbr.rel (%p111) target = $region24
      $region23: #{dropout_pallas.1} parent=5 // pred_region
        %s115 = ssub.s32 %s15, 1
        %s116 = sand.u32 %s28, 1
        %s117 = scalar_lea.sflag [#allocation5], %s116
        %s118 = sand.u32 %s28, 1
        %s119 = smul.addr %s118, 576
        %s120 = scalar_lea.vmem [#allocation4], %s119
        // Predicated region
        $region25: #{dropout_pallas.1} parent=23 // pred_check
          %p121 = pneg %p41
        $region26: #{dropout_pallas.1} parent=23 // pred_check_branch
          %123 = sbr.rel (%p121) target = $region28
        $region27: #{dropout_pallas.1} parent=23 // pred_region
          %125 = dma.done %s117, 9216
        $region28: #{dropout_pallas.1} parent=23 // pred_fallthru
          _
        %s126 = sand.u32 %s28, 1
        %s127 = scalar_lea.sflag [#allocation5], %s126
        %s128 = sand.u32 %s28, 1
        %s129 = smul.addr %s128, 576
        %s130 = scalar_lea.vmem [#allocation4], %s129
        %p131 = pneg %p41
        %p132 = pneg %p38
        %p133 = pneg %p67
        %p134 = pneg %p64
        %s135 = sand.u32 %s54, 1
        %s136 = scalar_lea.sflag [#allocation6], %s135
        %s137 = sand.u32 %s54, 1
        %s138 = smul.addr %s137, 576
        %s139 = scalar_lea.vmem [#allocation7], %s138
        %s140 = smul.u32 12, %s20
        %s141 = smul.u32 12, %s20
        %s142 = smul.u32 %s20, 96
        %v143 = vlaneseq
        %v144 = vshrl.u32 %v143, 7
        %v145 = vadd.s32 %v144, 8
        %v146 = vadd.s32 %v144, 16
        %v147 = vadd.s32 %v144, 24
        %v148 = vadd.s32 %v144, 32
        %v149 = vadd.s32 %v144, 40
        %v150 = vadd.s32 %v144, 48
        %v151 = vadd.s32 %v144, 56
        %v152 = vadd.s32 %v144, 64
        %v153 = vadd.s32 %v144, 72
        %v154 = vadd.s32 %v144, 80
        %v155 = vadd.s32 %v144, 88
        %v156 = vlaneseq
        %v157 = vand.u32 %v156, 127
        %v158 = vadd.s32 %v157, 128
        %v159 = vadd.s32 %v157, 256
        %v160 = vadd.s32 %v157, 384
        %v161 = vadd.s32 %v157, 512
        %v162 = vadd.s32 %v157, 640
        %v163 = vstv %s142
        %v164 = vadd.s32 %v163, %v144
        %v165 = vadd.s32 %v163, %v145
        %v166 = vadd.s32 %v163, %v146
        %v167 = vadd.s32 %v163, %v147
        %v168 = vadd.s32 %v163, %v148
        %v169 = vadd.s32 %v163, %v149
        %v170 = vadd.s32 %v163, %v150
        %v171 = vadd.s32 %v163, %v151
        %v172 = vadd.s32 %v163, %v152
        %v173 = vadd.s32 %v163, %v153
        %v174 = vadd.s32 %v163, %v154
        %v175 = vadd.s32 %v163, %v155
        %v176 = vmul.u32 %v164, 768
        %v177 = vmul.u32 %v165, 768
        %v178 = vmul.u32 %v166, 768
        %v179 = vmul.u32 %v167, 768
        %v180 = vmul.u32 %v168, 768
        %v181 = vmul.u32 %v169, 768
        %v182 = vmul.u32 %v170, 768
        %v183 = vmul.u32 %v171, 768
        %v184 = vmul.u32 %v172, 768
        %v185 = vmul.u32 %v173, 768
        %v186 = vmul.u32 %v174, 768
        %v187 = vmul.u32 %v175, 768
        %v188 = vadd.s32 %v176, %v157
        %v189 = vadd.s32 %v176, %v158
        %v190 = vadd.s32 %v176, %v159
        %v191 = vadd.s32 %v176, %v160
        %v192 = vadd.s32 %v176, %v161
        %v193 = vadd.s32 %v176, %v162
        %v194 = vadd.s32 %v177, %v157
        %v195 = vadd.s32 %v177, %v158
        %v196 = vadd.s32 %v177, %v159
        %v197 = vadd.s32 %v177, %v160
        %v198 = vadd.s32 %v177, %v161
        %v199 = vadd.s32 %v177, %v162
        %v200 = vadd.s32 %v178, %v157
        %v201 = vadd.s32 %v178, %v158
        %v202 = vadd.s32 %v178, %v159
        %v203 = vadd.s32 %v178, %v160
        %v204 = vadd.s32 %v178, %v161
        %v205 = vadd.s32 %v178, %v162
        %v206 = vadd.s32 %v179, %v157
        %v207 = vadd.s32 %v179, %v158
        %v208 = vadd.s32 %v179, %v159
        %v209 = vadd.s32 %v179, %v160
        %v210 = vadd.s32 %v179, %v161
        %v211 = vadd.s32 %v179, %v162
        %v212 = vadd.s32 %v180, %v157
        %v213 = vadd.s32 %v180, %v158
        %v214 = vadd.s32 %v180, %v159
        %v215 = vadd.s32 %v180, %v160
        %v216 = vadd.s32 %v180, %v161
        %v217 = vadd.s32 %v180, %v162
        %v218 = vadd.s32 %v181, %v157
        %v219 = vadd.s32 %v181, %v158
        %v220 = vadd.s32 %v181, %v159
        %v221 = vadd.s32 %v181, %v160
        %v222 = vadd.s32 %v181, %v161
        %v223 = vadd.s32 %v181, %v162
        %v224 = vadd.s32 %v182, %v157
        %v225 = vadd.s32 %v182, %v158
        %v226 = vadd.s32 %v182, %v159
        %v227 = vadd.s32 %v182, %v160
        %v228 = vadd.s32 %v182, %v161
        %v229 = vadd.s32 %v182, %v162
        %v230 = vadd.s32 %v183, %v157
        %v231 = vadd.s32 %v183, %v158
        %v232 = vadd.s32 %v183, %v159
        %v233 = vadd.s32 %v183, %v160
        %v234 = vadd.s32 %v183, %v161
        %v235 = vadd.s32 %v183, %v162
        %v236 = vadd.s32 %v184, %v157
        %v237 = vadd.s32 %v184, %v158
        %v238 = vadd.s32 %v184, %v159
        %v239 = vadd.s32 %v184, %v160
        %v240 = vadd.s32 %v184, %v161
        %v241 = vadd.s32 %v184, %v162
        %v242 = vadd.s32 %v185, %v157
        %v243 = vadd.s32 %v185, %v158
        %v244 = vadd.s32 %v185, %v159
        %v245 = vadd.s32 %v185, %v160
        %v246 = vadd.s32 %v185, %v161
        %v247 = vadd.s32 %v185, %v162
        %v248 = vadd.s32 %v186, %v157
        %v249 = vadd.s32 %v186, %v158
        %v250 = vadd.s32 %v186, %v159
        %v251 = vadd.s32 %v186, %v160
        %v252 = vadd.s32 %v186, %v161
        %v253 = vadd.s32 %v186, %v162
        %v254 = vadd.s32 %v187, %v157
        %v255 = vadd.s32 %v187, %v158
        %v256 = vadd.s32 %v187, %v159
        %v257 = vadd.s32 %v187, %v160
        %v258 = vadd.s32 %v187, %v161
        %v259 = vadd.s32 %v187, %v162
        %s260 = sld [smem:[#allocation3]]
        %s261 = smul.u32 %s260, 2654435769
        %v262 = vstv %s261
        %v263 = vadd.s32 %v188, %v262
        %v264 = vadd.s32 %v189, %v262
        %v265 = vadd.s32 %v190, %v262
        %v266 = vadd.s32 %v191, %v262
        %v267 = vadd.s32 %v192, %v262
        %v268 = vadd.s32 %v193, %v262
        %v269 = vadd.s32 %v194, %v262
        %v270 = vadd.s32 %v195, %v262
        %v271 = vadd.s32 %v196, %v262
        %v272 = vadd.s32 %v197, %v262
        %v273 = vadd.s32 %v198, %v262
        %v274 = vadd.s32 %v199, %v262
        %v275 = vadd.s32 %v200, %v262
        %v276 = vadd.s32 %v201, %v262
        %v277 = vadd.s32 %v202, %v262
        %v278 = vadd.s32 %v203, %v262
        %v279 = vadd.s32 %v204, %v262
        %v280 = vadd.s32 %v205, %v262
        %v281 = vadd.s32 %v206, %v262
        %v282 = vadd.s32 %v207, %v262
        %v283 = vadd.s32 %v208, %v262
        %v284 = vadd.s32 %v209, %v262
        %v285 = vadd.s32 %v210, %v262
        %v286 = vadd.s32 %v211, %v262
        %v287 = vadd.s32 %v212, %v262
        %v288 = vadd.s32 %v213, %v262
        %v289 = vadd.s32 %v214, %v262
        %v290 = vadd.s32 %v215, %v262
        %v291 = vadd.s32 %v216, %v262
        %v292 = vadd.s32 %v217, %v262
        %v293 = vadd.s32 %v218, %v262
        %v294 = vadd.s32 %v219, %v262
        %v295 = vadd.s32 %v220, %v262
        %v296 = vadd.s32 %v221, %v262
        %v297 = vadd.s32 %v222, %v262
        %v298 = vadd.s32 %v223, %v262
        %v299 = vadd.s32 %v224, %v262
        %v300 = vadd.s32 %v225, %v262
        %v301 = vadd.s32 %v226, %v262
        %v302 = vadd.s32 %v227, %v262
        %v303 = vadd.s32 %v228, %v262
        %v304 = vadd.s32 %v229, %v262
        %v305 = vadd.s32 %v230, %v262
        %v306 = vadd.s32 %v231, %v262
        %v307 = vadd.s32 %v232, %v262
        %v308 = vadd.s32 %v233, %v262
        %v309 = vadd.s32 %v234, %v262
        %v310 = vadd.s32 %v235, %v262
        %v311 = vadd.s32 %v236, %v262
        %v312 = vadd.s32 %v237, %v262
        %v313 = vadd.s32 %v238, %v262
        %v314 = vadd.s32 %v239, %v262
        %v315 = vadd.s32 %v240, %v262
        %v316 = vadd.s32 %v241, %v262
        %v317 = vadd.s32 %v242, %v262
        %v318 = vadd.s32 %v243, %v262
        %v319 = vadd.s32 %v244, %v262
        %v320 = vadd.s32 %v245, %v262
        %v321 = vadd.s32 %v246, %v262
        %v322 = vadd.s32 %v247, %v262
        %v323 = vadd.s32 %v248, %v262
        %v324 = vadd.s32 %v249, %v262
        %v325 = vadd.s32 %v250, %v262
        %v326 = vadd.s32 %v251, %v262
        %v327 = vadd.s32 %v252, %v262
        %v328 = vadd.s32 %v253, %v262
        %v329 = vadd.s32 %v254, %v262
        %v330 = vadd.s32 %v255, %v262
        %v331 = vadd.s32 %v256, %v262
        %v332 = vadd.s32 %v257, %v262
        %v333 = vadd.s32 %v258, %v262
        %v334 = vadd.s32 %v259, %v262
        %v335 = vshrl.u32 %v263, 16
        %v336 = vshrl.u32 %v264, 16
        %v337 = vshrl.u32 %v265, 16
        %v338 = vshrl.u32 %v266, 16
        %v339 = vshrl.u32 %v267, 16
        %v340 = vshrl.u32 %v268, 16
        %v341 = vshrl.u32 %v269, 16
        %v342 = vshrl.u32 %v270, 16
        %v343 = vshrl.u32 %v271, 16
        %v344 = vshrl.u32 %v272, 16
        %v345 = vshrl.u32 %v273, 16
        %v346 = vshrl.u32 %v274, 16
        %v347 = vshrl.u32 %v275, 16
        %v348 = vshrl.u32 %v276, 16
        %v349 = vshrl.u32 %v277, 16
        %v350 = vshrl.u32 %v278, 16
        %v351 = vshrl.u32 %v279, 16
        %v352 = vshrl.u32 %v280, 16
        %v353 = vshrl.u32 %v281, 16
        %v354 = vshrl.u32 %v282, 16
        %v355 = vshrl.u32 %v283, 16
        %v356 = vshrl.u32 %v284, 16
        %v357 = vshrl.u32 %v285, 16
        %v358 = vshrl.u32 %v286, 16
        %v359 = vshrl.u32 %v287, 16
        %v360 = vshrl.u32 %v288, 16
        %v361 = vshrl.u32 %v289, 16
        %v362 = vshrl.u32 %v290, 16
        %v363 = vshrl.u32 %v291, 16
        %v364 = vshrl.u32 %v292, 16
        %v365 = vshrl.u32 %v293, 16
        %v366 = vshrl.u32 %v294, 16
        %v367 = vshrl.u32 %v295, 16
        %v368 = vshrl.u32 %v296, 16
        %v369 = vshrl.u32 %v297, 16
        %v370 = vshrl.u32 %v298, 16
        %v371 = vshrl.u32 %v299, 16
        %v372 = vshrl.u32 %v300, 16
        %v373 = vshrl.u32 %v301, 16
        %v374 = vshrl.u32 %v302, 16
        %v375 = vshrl.u32 %v303, 16
        %v376 = vshrl.u32 %v304, 16
        %v377 = vshrl.u32 %v305, 16
        %v378 = vshrl.u32 %v306, 16
        %v379 = vshrl.u32 %v307, 16
        %v380 = vshrl.u32 %v308, 16
        %v381 = vshrl.u32 %v309, 16
        %v382 = vshrl.u32 %v310, 16
        %v383 = vshrl.u32 %v311, 16
        %v384 = vshrl.u32 %v312, 16
        %v385 = vshrl.u32 %v313, 16
        %v386 = vshrl.u32 %v314, 16
        %v387 = vshrl.u32 %v315, 16
        %v388 = vshrl.u32 %v316, 16
        %v389 = vshrl.u32 %v317, 16
        %v390 = vshrl.u32 %v318, 16
        %v391 = vshrl.u32 %v319, 16
        %v392 = vshrl.u32 %v320, 16
        %v393 = vshrl.u32 %v321, 16
        %v394 = vshrl.u32 %v322, 16
        %v395 = vshrl.u32 %v323, 16
        %v396 = vshrl.u32 %v324, 16
        %v397 = vshrl.u32 %v325, 16
        %v398 = vshrl.u32 %v326, 16
        %v399 = vshrl.u32 %v327, 16
        %v400 = vshrl.u32 %v328, 16
        %v401 = vshrl.u32 %v329, 16
        %v402 = vshrl.u32 %v330, 16
        %v403 = vshrl.u32 %v331, 16
        %v404 = vshrl.u32 %v332, 16
        %v405 = vshrl.u32 %v333, 16
        %v406 = vshrl.u32 %v334, 16
        %v407 = vxor.u32 %v263, %v335
        %v408 = vxor.u32 %v264, %v336
        %v409 = vxor.u32 %v265, %v337
        %v410 = vxor.u32 %v266, %v338
        %v411 = vxor.u32 %v267, %v339
        %v412 = vxor.u32 %v268, %v340
        %v413 = vxor.u32 %v269, %v341
        %v414 = vxor.u32 %v270, %v342
        %v415 = vxor.u32 %v271, %v343
        %v416 = vxor.u32 %v272, %v344
        %v417 = vxor.u32 %v273, %v345
        %v418 = vxor.u32 %v274, %v346
        %v419 = vxor.u32 %v275, %v347
        %v420 = vxor.u32 %v276, %v348
        %v421 = vxor.u32 %v277, %v349
        %v422 = vxor.u32 %v278, %v350
        %v423 = vxor.u32 %v279, %v351
        %v424 = vxor.u32 %v280, %v352
        %v425 = vxor.u32 %v281, %v353
        %v426 = vxor.u32 %v282, %v354
        %v427 = vxor.u32 %v283, %v355
        %v428 = vxor.u32 %v284, %v356
        %v429 = vxor.u32 %v285, %v357
        %v430 = vxor.u32 %v286, %v358
        %v431 = vxor.u32 %v287, %v359
        %v432 = vxor.u32 %v288, %v360
        %v433 = vxor.u32 %v289, %v361
        %v434 = vxor.u32 %v290, %v362
        %v435 = vxor.u32 %v291, %v363
        %v436 = vxor.u32 %v292, %v364
        %v437 = vxor.u32 %v293, %v365
        %v438 = vxor.u32 %v294, %v366
        %v439 = vxor.u32 %v295, %v367
        %v440 = vxor.u32 %v296, %v368
        %v441 = vxor.u32 %v297, %v369
        %v442 = vxor.u32 %v298, %v370
        %v443 = vxor.u32 %v299, %v371
        %v444 = vxor.u32 %v300, %v372
        %v445 = vxor.u32 %v301, %v373
        %v446 = vxor.u32 %v302, %v374
        %v447 = vxor.u32 %v303, %v375
        %v448 = vxor.u32 %v304, %v376
        %v449 = vxor.u32 %v305, %v377
        %v450 = vxor.u32 %v306, %v378
        %v451 = vxor.u32 %v307, %v379
        %v452 = vxor.u32 %v308, %v380
        %v453 = vxor.u32 %v309, %v381
        %v454 = vxor.u32 %v310, %v382
        %v455 = vxor.u32 %v311, %v383
        %v456 = vxor.u32 %v312, %v384
        %v457 = vxor.u32 %v313, %v385
        %v458 = vxor.u32 %v314, %v386
        %v459 = vxor.u32 %v315, %v387
        %v460 = vxor.u32 %v316, %v388
        %v461 = vxor.u32 %v317, %v389
        %v462 = vxor.u32 %v318, %v390
        %v463 = vxor.u32 %v319, %v391
        %v464 = vxor.u32 %v320, %v392
        %v465 = vxor.u32 %v321, %v393
        %v466 = vxor.u32 %v322, %v394
        %v467 = vxor.u32 %v323, %v395
        %v468 = vxor.u32 %v324, %v396
        %v469 = vxor.u32 %v325, %v397
        %v470 = vxor.u32 %v326, %v398
        %v471 = vxor.u32 %v327, %v399
        %v472 = vxor.u32 %v328, %v400
        %v473 = vxor.u32 %v329, %v401
        %v474 = vxor.u32 %v330, %v402
        %v475 = vxor.u32 %v331, %v403
        %v476 = vxor.u32 %v332, %v404
        %v477 = vxor.u32 %v333, %v405
        %v478 = vxor.u32 %v334, %v406
        %v479 = vmul.u32 %v407, 2146121005
        %v480 = vmul.u32 %v408, 2146121005
        %v481 = vmul.u32 %v409, 2146121005
        %v482 = vmul.u32 %v410, 2146121005
        %v483 = vmul.u32 %v411, 2146121005
        %v484 = vmul.u32 %v412, 2146121005
        %v485 = vmul.u32 %v413, 2146121005
        %v486 = vmul.u32 %v414, 2146121005
        %v487 = vmul.u32 %v415, 2146121005
        %v488 = vmul.u32 %v416, 2146121005
        %v489 = vmul.u32 %v417, 2146121005
        %v490 = vmul.u32 %v418, 2146121005
        %v491 = vmul.u32 %v419, 2146121005
        %v492 = vmul.u32 %v420, 2146121005
        %v493 = vmul.u32 %v421, 2146121005
        %v494 = vmul.u32 %v422, 2146121005
        %v495 = vmul.u32 %v423, 2146121005
        %v496 = vmul.u32 %v424, 2146121005
        %v497 = vmul.u32 %v425, 2146121005
        %v498 = vmul.u32 %v426, 2146121005
        %v499 = vmul.u32 %v427, 2146121005
        %v500 = vmul.u32 %v428, 2146121005
        %v501 = vmul.u32 %v429, 2146121005
        %v502 = vmul.u32 %v430, 2146121005
        %v503 = vmul.u32 %v431, 2146121005
        %v504 = vmul.u32 %v432, 2146121005
        %v505 = vmul.u32 %v433, 2146121005
        %v506 = vmul.u32 %v434, 2146121005
        %v507 = vmul.u32 %v435, 2146121005
        %v508 = vmul.u32 %v436, 2146121005
        %v509 = vmul.u32 %v437, 2146121005
        %v510 = vmul.u32 %v438, 2146121005
        %v511 = vmul.u32 %v439, 2146121005
        %v512 = vmul.u32 %v440, 2146121005
        %v513 = vmul.u32 %v441, 2146121005
        %v514 = vmul.u32 %v442, 2146121005
        %v515 = vmul.u32 %v443, 2146121005
        %v516 = vmul.u32 %v444, 2146121005
        %v517 = vmul.u32 %v445, 2146121005
        %v518 = vmul.u32 %v446, 2146121005
        %v519 = vmul.u32 %v447, 2146121005
        %v520 = vmul.u32 %v448, 2146121005
        %v521 = vmul.u32 %v449, 2146121005
        %v522 = vmul.u32 %v450, 2146121005
        %v523 = vmul.u32 %v451, 2146121005
        %v524 = vmul.u32 %v452, 2146121005
        %v525 = vmul.u32 %v453, 2146121005
        %v526 = vmul.u32 %v454, 2146121005
        %v527 = vmul.u32 %v455, 2146121005
        %v528 = vmul.u32 %v456, 2146121005
        %v529 = vmul.u32 %v457, 2146121005
        %v530 = vmul.u32 %v458, 2146121005
        %v531 = vmul.u32 %v459, 2146121005
        %v532 = vmul.u32 %v460, 2146121005
        %v533 = vmul.u32 %v461, 2146121005
        %v534 = vmul.u32 %v462, 2146121005
        %v535 = vmul.u32 %v463, 2146121005
        %v536 = vmul.u32 %v464, 2146121005
        %v537 = vmul.u32 %v465, 2146121005
        %v538 = vmul.u32 %v466, 2146121005
        %v539 = vmul.u32 %v467, 2146121005
        %v540 = vmul.u32 %v468, 2146121005
        %v541 = vmul.u32 %v469, 2146121005
        %v542 = vmul.u32 %v470, 2146121005
        %v543 = vmul.u32 %v471, 2146121005
        %v544 = vmul.u32 %v472, 2146121005
        %v545 = vmul.u32 %v473, 2146121005
        %v546 = vmul.u32 %v474, 2146121005
        %v547 = vmul.u32 %v475, 2146121005
        %v548 = vmul.u32 %v476, 2146121005
        %v549 = vmul.u32 %v477, 2146121005
        %v550 = vmul.u32 %v478, 2146121005
        %v551 = vshrl.u32 %v479, 15
        %v552 = vshrl.u32 %v480, 15
        %v553 = vshrl.u32 %v481, 15
        %v554 = vshrl.u32 %v482, 15
        %v555 = vshrl.u32 %v483, 15
        %v556 = vshrl.u32 %v484, 15
        %v557 = vshrl.u32 %v485, 15
        %v558 = vshrl.u32 %v486, 15
        %v559 = vshrl.u32 %v487, 15
        %v560 = vshrl.u32 %v488, 15
        %v561 = vshrl.u32 %v489, 15
        %v562 = vshrl.u32 %v490, 15
        %v563 = vshrl.u32 %v491, 15
        %v564 = vshrl.u32 %v492, 15
        %v565 = vshrl.u32 %v493, 15
        %v566 = vshrl.u32 %v494, 15
        %v567 = vshrl.u32 %v495, 15
        %v568 = vshrl.u32 %v496, 15
        %v569 = vshrl.u32 %v497, 15
        %v570 = vshrl.u32 %v498, 15
        %v571 = vshrl.u32 %v499, 15
        %v572 = vshrl.u32 %v500, 15
        %v573 = vshrl.u32 %v501, 15
        %v574 = vshrl.u32 %v502, 15
        %v575 = vshrl.u32 %v503, 15
        %v576 = vshrl.u32 %v504, 15
        %v577 = vshrl.u32 %v505, 15
        %v578 = vshrl.u32 %v506, 15
        %v579 = vshrl.u32 %v507, 15
        %v580 = vshrl.u32 %v508, 15
        %v581 = vshrl.u32 %v509, 15
        %v582 = vshrl.u32 %v510, 15
        %v583 = vshrl.u32 %v511, 15
        %v584 = vshrl.u32 %v512, 15
        %v585 = vshrl.u32 %v513, 15
        %v586 = vshrl.u32 %v514, 15
        %v587 = vshrl.u32 %v515, 15
        %v588 = vshrl.u32 %v516, 15
        %v589 = vshrl.u32 %v517, 15
        %v590 = vshrl.u32 %v518, 15
        %v591 = vshrl.u32 %v519, 15
        %v592 = vshrl.u32 %v520, 15
        %v593 = vshrl.u32 %v521, 15
        %v594 = vshrl.u32 %v522, 15
        %v595 = vshrl.u32 %v523, 15
        %v596 = vshrl.u32 %v524, 15
        %v597 = vshrl.u32 %v525, 15
        %v598 = vshrl.u32 %v526, 15
        %v599 = vshrl.u32 %v527, 15
        %v600 = vshrl.u32 %v528, 15
        %v601 = vshrl.u32 %v529, 15
        %v602 = vshrl.u32 %v530, 15
        %v603 = vshrl.u32 %v531, 15
        %v604 = vshrl.u32 %v532, 15
        %v605 = vshrl.u32 %v533, 15
        %v606 = vshrl.u32 %v534, 15
        %v607 = vshrl.u32 %v535, 15
        %v608 = vshrl.u32 %v536, 15
        %v609 = vshrl.u32 %v537, 15
        %v610 = vshrl.u32 %v538, 15
        %v611 = vshrl.u32 %v539, 15
        %v612 = vshrl.u32 %v540, 15
        %v613 = vshrl.u32 %v541, 15
        %v614 = vshrl.u32 %v542, 15
        %v615 = vshrl.u32 %v543, 15
        %v616 = vshrl.u32 %v544, 15
        %v617 = vshrl.u32 %v545, 15
        %v618 = vshrl.u32 %v546, 15
        %v619 = vshrl.u32 %v547, 15
        %v620 = vshrl.u32 %v548, 15
        %v621 = vshrl.u32 %v549, 15
        %v622 = vshrl.u32 %v550, 15
        %v623 = vxor.u32 %v479, %v551
        %v624 = vxor.u32 %v480, %v552
        %v625 = vxor.u32 %v481, %v553
        %v626 = vxor.u32 %v482, %v554
        %v627 = vxor.u32 %v483, %v555
        %v628 = vxor.u32 %v484, %v556
        %v629 = vxor.u32 %v485, %v557
        %v630 = vxor.u32 %v486, %v558
        %v631 = vxor.u32 %v487, %v559
        %v632 = vxor.u32 %v488, %v560
        %v633 = vxor.u32 %v489, %v561
        %v634 = vxor.u32 %v490, %v562
        %v635 = vxor.u32 %v491, %v563
        %v636 = vxor.u32 %v492, %v564
        %v637 = vxor.u32 %v493, %v565
        %v638 = vxor.u32 %v494, %v566
        %v639 = vxor.u32 %v495, %v567
        %v640 = vxor.u32 %v496, %v568
        %v641 = vxor.u32 %v497, %v569
        %v642 = vxor.u32 %v498, %v570
        %v643 = vxor.u32 %v499, %v571
        %v644 = vxor.u32 %v500, %v572
        %v645 = vxor.u32 %v501, %v573
        %v646 = vxor.u32 %v502, %v574
        %v647 = vxor.u32 %v503, %v575
        %v648 = vxor.u32 %v504, %v576
        %v649 = vxor.u32 %v505, %v577
        %v650 = vxor.u32 %v506, %v578
        %v651 = vxor.u32 %v507, %v579
        %v652 = vxor.u32 %v508, %v580
        %v653 = vxor.u32 %v509, %v581
        %v654 = vxor.u32 %v510, %v582
        %v655 = vxor.u32 %v511, %v583
        %v656 = vxor.u32 %v512, %v584
        %v657 = vxor.u32 %v513, %v585
        %v658 = vxor.u32 %v514, %v586
        %v659 = vxor.u32 %v515, %v587
        %v660 = vxor.u32 %v516, %v588
        %v661 = vxor.u32 %v517, %v589
        %v662 = vxor.u32 %v518, %v590
        %v663 = vxor.u32 %v519, %v591
        %v664 = vxor.u32 %v520, %v592
        %v665 = vxor.u32 %v521, %v593
        %v666 = vxor.u32 %v522, %v594
        %v667 = vxor.u32 %v523, %v595
        %v668 = vxor.u32 %v524, %v596
        %v669 = vxor.u32 %v525, %v597
        %v670 = vxor.u32 %v526, %v598
        %v671 = vxor.u32 %v527, %v599
        %v672 = vxor.u32 %v528, %v600
        %v673 = vxor.u32 %v529, %v601
        %v674 = vxor.u32 %v530, %v602
        %v675 = vxor.u32 %v531, %v603
        %v676 = vxor.u32 %v532, %v604
        %v677 = vxor.u32 %v533, %v605
        %v678 = vxor.u32 %v534, %v606
        %v679 = vxor.u32 %v535, %v607
        %v680 = vxor.u32 %v536, %v608
        %v681 = vxor.u32 %v537, %v609
        %v682 = vxor.u32 %v538, %v610
        %v683 = vxor.u32 %v539, %v611
        %v684 = vxor.u32 %v540, %v612
        %v685 = vxor.u32 %v541, %v613
        %v686 = vxor.u32 %v542, %v614
        %v687 = vxor.u32 %v543, %v615
        %v688 = vxor.u32 %v544, %v616
        %v689 = vxor.u32 %v545, %v617
        %v690 = vxor.u32 %v546, %v618
        %v691 = vxor.u32 %v547, %v619
        %v692 = vxor.u32 %v548, %v620
        %v693 = vxor.u32 %v549, %v621
        %v694 = vxor.u32 %v550, %v622
        %v695 = vmul.u32 %v623, 2221713035
        %v696 = vmul.u32 %v624, 2221713035
        %v697 = vmul.u32 %v625, 2221713035
        %v698 = vmul.u32 %v626, 2221713035
        %v699 = vmul.u32 %v627, 2221713035
        %v700 = vmul.u32 %v628, 2221713035
        %v701 = vmul.u32 %v629, 2221713035
        %v702 = vmul.u32 %v630, 2221713035
        %v703 = vmul.u32 %v631, 2221713035
        %v704 = vmul.u32 %v632, 2221713035
        %v705 = vmul.u32 %v633, 2221713035
        %v706 = vmul.u32 %v634, 2221713035
        %v707 = vmul.u32 %v635, 2221713035
        %v708 = vmul.u32 %v636, 2221713035
        %v709 = vmul.u32 %v637, 2221713035
        %v710 = vmul.u32 %v638, 2221713035
        %v711 = vmul.u32 %v639, 2221713035
        %v712 = vmul.u32 %v640, 2221713035
        %v713 = vmul.u32 %v641, 2221713035
        %v714 = vmul.u32 %v642, 2221713035
        %v715 = vmul.u32 %v643, 2221713035
        %v716 = vmul.u32 %v644, 2221713035
        %v717 = vmul.u32 %v645, 2221713035
        %v718 = vmul.u32 %v646, 2221713035
        %v719 = vmul.u32 %v647, 2221713035
        %v720 = vmul.u32 %v648, 2221713035
        %v721 = vmul.u32 %v649, 2221713035
        %v722 = vmul.u32 %v650, 2221713035
        %v723 = vmul.u32 %v651, 2221713035
        %v724 = vmul.u32 %v652, 2221713035
        %v725 = vmul.u32 %v653, 2221713035
        %v726 = vmul.u32 %v654, 2221713035
        %v727 = vmul.u32 %v655, 2221713035
        %v728 = vmul.u32 %v656, 2221713035
        %v729 = vmul.u32 %v657, 2221713035
        %v730 = vmul.u32 %v658, 2221713035
        %v731 = vmul.u32 %v659, 2221713035
        %v732 = vmul.u32 %v660, 2221713035
        %v733 = vmul.u32 %v661, 2221713035
        %v734 = vmul.u32 %v662, 2221713035
        %v735 = vmul.u32 %v663, 2221713035
        %v736 = vmul.u32 %v664, 2221713035
        %v737 = vmul.u32 %v665, 2221713035
        %v738 = vmul.u32 %v666, 2221713035
        %v739 = vmul.u32 %v667, 2221713035
        %v740 = vmul.u32 %v668, 2221713035
        %v741 = vmul.u32 %v669, 2221713035
        %v742 = vmul.u32 %v670, 2221713035
        %v743 = vmul.u32 %v671, 2221713035
        %v744 = vmul.u32 %v672, 2221713035
        %v745 = vmul.u32 %v673, 2221713035
        %v746 = vmul.u32 %v674, 2221713035
        %v747 = vmul.u32 %v675, 2221713035
        %v748 = vmul.u32 %v676, 2221713035
        %v749 = vmul.u32 %v677, 2221713035
        %v750 = vmul.u32 %v678, 2221713035
        %v751 = vmul.u32 %v679, 2221713035
        %v752 = vmul.u32 %v680, 2221713035
        %v753 = vmul.u32 %v681, 2221713035
        %v754 = vmul.u32 %v682, 2221713035
        %v755 = vmul.u32 %v683, 2221713035
        %v756 = vmul.u32 %v684, 2221713035
        %v757 = vmul.u32 %v685, 2221713035
        %v758 = vmul.u32 %v686, 2221713035
        %v759 = vmul.u32 %v687, 2221713035
        %v760 = vmul.u32 %v688, 2221713035
        %v761 = vmul.u32 %v689, 2221713035
        %v762 = vmul.u32 %v690, 2221713035
        %v763 = vmul.u32 %v691, 2221713035
        %v764 = vmul.u32 %v692, 2221713035
        %v765 = vmul.u32 %v693, 2221713035
        %v766 = vmul.u32 %v694, 2221713035
        %v767 = vshrl.u32 %v695, 16
        %v768 = vshrl.u32 %v696, 16
        %v769 = vshrl.u32 %v697, 16
        %v770 = vshrl.u32 %v698, 16
        %v771 = vshrl.u32 %v699, 16
        %v772 = vshrl.u32 %v700, 16
        %v773 = vshrl.u32 %v701, 16
        %v774 = vshrl.u32 %v702, 16
        %v775 = vshrl.u32 %v703, 16
        %v776 = vshrl.u32 %v704, 16
        %v777 = vshrl.u32 %v705, 16
        %v778 = vshrl.u32 %v706, 16
        %v779 = vshrl.u32 %v707, 16
        %v780 = vshrl.u32 %v708, 16
        %v781 = vshrl.u32 %v709, 16
        %v782 = vshrl.u32 %v710, 16
        %v783 = vshrl.u32 %v711, 16
        %v784 = vshrl.u32 %v712, 16
        %v785 = vshrl.u32 %v713, 16
        %v786 = vshrl.u32 %v714, 16
        %v787 = vshrl.u32 %v715, 16
        %v788 = vshrl.u32 %v716, 16
        %v789 = vshrl.u32 %v717, 16
        %v790 = vshrl.u32 %v718, 16
        %v791 = vshrl.u32 %v719, 16
        %v792 = vshrl.u32 %v720, 16
        %v793 = vshrl.u32 %v721, 16
        %v794 = vshrl.u32 %v722, 16
        %v795 = vshrl.u32 %v723, 16
        %v796 = vshrl.u32 %v724, 16
        %v797 = vshrl.u32 %v725, 16
        %v798 = vshrl.u32 %v726, 16
        %v799 = vshrl.u32 %v727, 16
        %v800 = vshrl.u32 %v728, 16
        %v801 = vshrl.u32 %v729, 16
        %v802 = vshrl.u32 %v730, 16
        %v803 = vshrl.u32 %v731, 16
        %v804 = vshrl.u32 %v732, 16
        %v805 = vshrl.u32 %v733, 16
        %v806 = vshrl.u32 %v734, 16
        %v807 = vshrl.u32 %v735, 16
        %v808 = vshrl.u32 %v736, 16
        %v809 = vshrl.u32 %v737, 16
        %v810 = vshrl.u32 %v738, 16
        %v811 = vshrl.u32 %v739, 16
        %v812 = vshrl.u32 %v740, 16
        %v813 = vshrl.u32 %v741, 16
        %v814 = vshrl.u32 %v742, 16
        %v815 = vshrl.u32 %v743, 16
        %v816 = vshrl.u32 %v744, 16
        %v817 = vshrl.u32 %v745, 16
        %v818 = vshrl.u32 %v746, 16
        %v819 = vshrl.u32 %v747, 16
        %v820 = vshrl.u32 %v748, 16
        %v821 = vshrl.u32 %v749, 16
        %v822 = vshrl.u32 %v750, 16
        %v823 = vshrl.u32 %v751, 16
        %v824 = vshrl.u32 %v752, 16
        %v825 = vshrl.u32 %v753, 16
        %v826 = vshrl.u32 %v754, 16
        %v827 = vshrl.u32 %v755, 16
        %v828 = vshrl.u32 %v756, 16
        %v829 = vshrl.u32 %v757, 16
        %v830 = vshrl.u32 %v758, 16
        %v831 = vshrl.u32 %v759, 16
        %v832 = vshrl.u32 %v760, 16
        %v833 = vshrl.u32 %v761, 16
        %v834 = vshrl.u32 %v762, 16
        %v835 = vshrl.u32 %v763, 16
        %v836 = vshrl.u32 %v764, 16
        %v837 = vshrl.u32 %v765, 16
        %v838 = vshrl.u32 %v766, 16
        %v839 = vxor.u32 %v695, %v767
        %v840 = vxor.u32 %v696, %v768
        %v841 = vxor.u32 %v697, %v769
        %v842 = vxor.u32 %v698, %v770
        %v843 = vxor.u32 %v699, %v771
        %v844 = vxor.u32 %v700, %v772
        %v845 = vxor.u32 %v701, %v773
        %v846 = vxor.u32 %v702, %v774
        %v847 = vxor.u32 %v703, %v775
        %v848 = vxor.u32 %v704, %v776
        %v849 = vxor.u32 %v705, %v777
        %v850 = vxor.u32 %v706, %v778
        %v851 = vxor.u32 %v707, %v779
        %v852 = vxor.u32 %v708, %v780
        %v853 = vxor.u32 %v709, %v781
        %v854 = vxor.u32 %v710, %v782
        %v855 = vxor.u32 %v711, %v783
        %v856 = vxor.u32 %v712, %v784
        %v857 = vxor.u32 %v713, %v785
        %v858 = vxor.u32 %v714, %v786
        %v859 = vxor.u32 %v715, %v787
        %v860 = vxor.u32 %v716, %v788
        %v861 = vxor.u32 %v717, %v789
        %v862 = vxor.u32 %v718, %v790
        %v863 = vxor.u32 %v719, %v791
        %v864 = vxor.u32 %v720, %v792
        %v865 = vxor.u32 %v721, %v793
        %v866 = vxor.u32 %v722, %v794
        %v867 = vxor.u32 %v723, %v795
        %v868 = vxor.u32 %v724, %v796
        %v869 = vxor.u32 %v725, %v797
        %v870 = vxor.u32 %v726, %v798
        %v871 = vxor.u32 %v727, %v799
        %v872 = vxor.u32 %v728, %v800
        %v873 = vxor.u32 %v729, %v801
        %v874 = vxor.u32 %v730, %v802
        %v875 = vxor.u32 %v731, %v803
        %v876 = vxor.u32 %v732, %v804
        %v877 = vxor.u32 %v733, %v805
        %v878 = vxor.u32 %v734, %v806
        %v879 = vxor.u32 %v735, %v807
        %v880 = vxor.u32 %v736, %v808
        %v881 = vxor.u32 %v737, %v809
        %v882 = vxor.u32 %v738, %v810
        %v883 = vxor.u32 %v739, %v811
        %v884 = vxor.u32 %v740, %v812
        %v885 = vxor.u32 %v741, %v813
        %v886 = vxor.u32 %v742, %v814
        %v887 = vxor.u32 %v743, %v815
        %v888 = vxor.u32 %v744, %v816
        %v889 = vxor.u32 %v745, %v817
        %v890 = vxor.u32 %v746, %v818
        %v891 = vxor.u32 %v747, %v819
        %v892 = vxor.u32 %v748, %v820
        %v893 = vxor.u32 %v749, %v821
        %v894 = vxor.u32 %v750, %v822
        %v895 = vxor.u32 %v751, %v823
        %v896 = vxor.u32 %v752, %v824
        %v897 = vxor.u32 %v753, %v825
        %v898 = vxor.u32 %v754, %v826
        %v899 = vxor.u32 %v755, %v827
        %v900 = vxor.u32 %v756, %v828
        %v901 = vxor.u32 %v757, %v829
        %v902 = vxor.u32 %v758, %v830
        %v903 = vxor.u32 %v759, %v831
        %v904 = vxor.u32 %v760, %v832
        %v905 = vxor.u32 %v761, %v833
        %v906 = vxor.u32 %v762, %v834
        %v907 = vxor.u32 %v763, %v835
        %v908 = vxor.u32 %v764, %v836
        %v909 = vxor.u32 %v765, %v837
        %v910 = vxor.u32 %v766, %v838
        %v911 = vshrl.u32 %v839, 1
        %v912 = vshrl.u32 %v840, 1
        %v913 = vshrl.u32 %v841, 1
        %v914 = vshrl.u32 %v842, 1
        %v915 = vshrl.u32 %v843, 1
        %v916 = vshrl.u32 %v844, 1
        %v917 = vshrl.u32 %v845, 1
        %v918 = vshrl.u32 %v846, 1
        %v919 = vshrl.u32 %v847, 1
        %v920 = vshrl.u32 %v848, 1
        %v921 = vshrl.u32 %v849, 1
        %v922 = vshrl.u32 %v850, 1
        %v923 = vshrl.u32 %v851, 1
        %v924 = vshrl.u32 %v852, 1
        %v925 = vshrl.u32 %v853, 1
        %v926 = vshrl.u32 %v854, 1
        %v927 = vshrl.u32 %v855, 1
        %v928 = vshrl.u32 %v856, 1
        %v929 = vshrl.u32 %v857, 1
        %v930 = vshrl.u32 %v858, 1
        %v931 = vshrl.u32 %v859, 1
        %v932 = vshrl.u32 %v860, 1
        %v933 = vshrl.u32 %v861, 1
        %v934 = vshrl.u32 %v862, 1
        %v935 = vshrl.u32 %v863, 1
        %v936 = vshrl.u32 %v864, 1
        %v937 = vshrl.u32 %v865, 1
        %v938 = vshrl.u32 %v866, 1
        %v939 = vshrl.u32 %v867, 1
        %v940 = vshrl.u32 %v868, 1
        %v941 = vshrl.u32 %v869, 1
        %v942 = vshrl.u32 %v870, 1
        %v943 = vshrl.u32 %v871, 1
        %v944 = vshrl.u32 %v872, 1
        %v945 = vshrl.u32 %v873, 1
        %v946 = vshrl.u32 %v874, 1
        %v947 = vshrl.u32 %v875, 1
        %v948 = vshrl.u32 %v876, 1
        %v949 = vshrl.u32 %v877, 1
        %v950 = vshrl.u32 %v878, 1
        %v951 = vshrl.u32 %v879, 1
        %v952 = vshrl.u32 %v880, 1
        %v953 = vshrl.u32 %v881, 1
        %v954 = vshrl.u32 %v882, 1
        %v955 = vshrl.u32 %v883, 1
        %v956 = vshrl.u32 %v884, 1
        %v957 = vshrl.u32 %v885, 1
        %v958 = vshrl.u32 %v886, 1
        %v959 = vshrl.u32 %v887, 1
        %v960 = vshrl.u32 %v888, 1
        %v961 = vshrl.u32 %v889, 1
        %v962 = vshrl.u32 %v890, 1
        %v963 = vshrl.u32 %v891, 1
        %v964 = vshrl.u32 %v892, 1
        %v965 = vshrl.u32 %v893, 1
        %v966 = vshrl.u32 %v894, 1
        %v967 = vshrl.u32 %v895, 1
        %v968 = vshrl.u32 %v896, 1
        %v969 = vshrl.u32 %v897, 1
        %v970 = vshrl.u32 %v898, 1
        %v971 = vshrl.u32 %v899, 1
        %v972 = vshrl.u32 %v900, 1
        %v973 = vshrl.u32 %v901, 1
        %v974 = vshrl.u32 %v902, 1
        %v975 = vshrl.u32 %v903, 1
        %v976 = vshrl.u32 %v904, 1
        %v977 = vshrl.u32 %v905, 1
        %v978 = vshrl.u32 %v906, 1
        %v979 = vshrl.u32 %v907, 1
        %v980 = vshrl.u32 %v908, 1
        %v981 = vshrl.u32 %v909, 1
        %v982 = vshrl.u32 %v910, 1
        %vm983 = vcmp.ge.s32.totalorder %v911, 214748364
        %vm984 = vcmp.ge.s32.totalorder %v912, 214748364
        %vm985 = vcmp.ge.s32.totalorder %v913, 214748364
        %vm986 = vcmp.ge.s32.totalorder %v914, 214748364
        %vm987 = vcmp.ge.s32.totalorder %v915, 214748364
        %vm988 = vcmp.ge.s32.totalorder %v916, 214748364
        %vm989 = vcmp.ge.s32.totalorder %v917, 214748364
        %vm990 = vcmp.ge.s32.totalorder %v918, 214748364
        %vm991 = vcmp.ge.s32.totalorder %v919, 214748364
        %vm992 = vcmp.ge.s32.totalorder %v920, 214748364
        %vm993 = vcmp.ge.s32.totalorder %v921, 214748364
        %vm994 = vcmp.ge.s32.totalorder %v922, 214748364
        %vm995 = vcmp.ge.s32.totalorder %v923, 214748364
        %vm996 = vcmp.ge.s32.totalorder %v924, 214748364
        %vm997 = vcmp.ge.s32.totalorder %v925, 214748364
        %vm998 = vcmp.ge.s32.totalorder %v926, 214748364
        %vm999 = vcmp.ge.s32.totalorder %v927, 214748364
        %vm1000 = vcmp.ge.s32.totalorder %v928, 214748364
        %vm1001 = vcmp.ge.s32.totalorder %v929, 214748364
        %vm1002 = vcmp.ge.s32.totalorder %v930, 214748364
        %vm1003 = vcmp.ge.s32.totalorder %v931, 214748364
        %vm1004 = vcmp.ge.s32.totalorder %v932, 214748364
        %vm1005 = vcmp.ge.s32.totalorder %v933, 214748364
        %vm1006 = vcmp.ge.s32.totalorder %v934, 214748364
        %vm1007 = vcmp.ge.s32.totalorder %v935, 214748364
        %vm1008 = vcmp.ge.s32.totalorder %v936, 214748364
        %vm1009 = vcmp.ge.s32.totalorder %v937, 214748364
        %vm1010 = vcmp.ge.s32.totalorder %v938, 214748364
        %vm1011 = vcmp.ge.s32.totalorder %v939, 214748364
        %vm1012 = vcmp.ge.s32.totalorder %v940, 214748364
        %vm1013 = vcmp.ge.s32.totalorder %v941, 214748364
        %vm1014 = vcmp.ge.s32.totalorder %v942, 214748364
        %vm1015 = vcmp.ge.s32.totalorder %v943, 214748364
        %vm1016 = vcmp.ge.s32.totalorder %v944, 214748364
        %vm1017 = vcmp.ge.s32.totalorder %v945, 214748364
        %vm1018 = vcmp.ge.s32.totalorder %v946, 214748364
        %vm1019 = vcmp.ge.s32.totalorder %v947, 214748364
        %vm1020 = vcmp.ge.s32.totalorder %v948, 214748364
        %vm1021 = vcmp.ge.s32.totalorder %v949, 214748364
        %vm1022 = vcmp.ge.s32.totalorder %v950, 214748364
        %vm1023 = vcmp.ge.s32.totalorder %v951, 214748364
        %vm1024 = vcmp.ge.s32.totalorder %v952, 214748364
        %vm1025 = vcmp.ge.s32.totalorder %v953, 214748364
        %vm1026 = vcmp.ge.s32.totalorder %v954, 214748364
        %vm1027 = vcmp.ge.s32.totalorder %v955, 214748364
        %vm1028 = vcmp.ge.s32.totalorder %v956, 214748364
        %vm1029 = vcmp.ge.s32.totalorder %v957, 214748364
        %vm1030 = vcmp.ge.s32.totalorder %v958, 214748364
        %vm1031 = vcmp.ge.s32.totalorder %v959, 214748364
        %vm1032 = vcmp.ge.s32.totalorder %v960, 214748364
        %vm1033 = vcmp.ge.s32.totalorder %v961, 214748364
        %vm1034 = vcmp.ge.s32.totalorder %v962, 214748364
        %vm1035 = vcmp.ge.s32.totalorder %v963, 214748364
        %vm1036 = vcmp.ge.s32.totalorder %v964, 214748364
        %vm1037 = vcmp.ge.s32.totalorder %v965, 214748364
        %vm1038 = vcmp.ge.s32.totalorder %v966, 214748364
        %vm1039 = vcmp.ge.s32.totalorder %v967, 214748364
        %vm1040 = vcmp.ge.s32.totalorder %v968, 214748364
        %vm1041 = vcmp.ge.s32.totalorder %v969, 214748364
        %vm1042 = vcmp.ge.s32.totalorder %v970, 214748364
        %vm1043 = vcmp.ge.s32.totalorder %v971, 214748364
        %vm1044 = vcmp.ge.s32.totalorder %v972, 214748364
        %vm1045 = vcmp.ge.s32.totalorder %v973, 214748364
        %vm1046 = vcmp.ge.s32.totalorder %v974, 214748364
        %vm1047 = vcmp.ge.s32.totalorder %v975, 214748364
        %vm1048 = vcmp.ge.s32.totalorder %v976, 214748364
        %vm1049 = vcmp.ge.s32.totalorder %v977, 214748364
        %vm1050 = vcmp.ge.s32.totalorder %v978, 214748364
        %vm1051 = vcmp.ge.s32.totalorder %v979, 214748364
        %vm1052 = vcmp.ge.s32.totalorder %v980, 214748364
        %vm1053 = vcmp.ge.s32.totalorder %v981, 214748364
        %vm1054 = vcmp.ge.s32.totalorder %v982, 214748364
        %v1055 = vsel %vm983, 1, 0
        %v1056 = vsel %vm984, 1, 0
        %v1057 = vsel %vm985, 1, 0
        %v1058 = vsel %vm986, 1, 0
        %v1059 = vsel %vm987, 1, 0
        %v1060 = vsel %vm988, 1, 0
        %v1061 = vsel %vm989, 1, 0
        %v1062 = vsel %vm990, 1, 0
        %v1063 = vsel %vm991, 1, 0
        %v1064 = vsel %vm992, 1, 0
        %v1065 = vsel %vm993, 1, 0
        %v1066 = vsel %vm994, 1, 0
        %v1067 = vsel %vm995, 1, 0
        %v1068 = vsel %vm996, 1, 0
        %v1069 = vsel %vm997, 1, 0
        %v1070 = vsel %vm998, 1, 0
        %v1071 = vsel %vm999, 1, 0
        %v1072 = vsel %vm1000, 1, 0
        %v1073 = vsel %vm1001, 1, 0
        %v1074 = vsel %vm1002, 1, 0
        %v1075 = vsel %vm1003, 1, 0
        %v1076 = vsel %vm1004, 1, 0
        %v1077 = vsel %vm1005, 1, 0
        %v1078 = vsel %vm1006, 1, 0
        %v1079 = vsel %vm1007, 1, 0
        %v1080 = vsel %vm1008, 1, 0
        %v1081 = vsel %vm1009, 1, 0
        %v1082 = vsel %vm1010, 1, 0
        %v1083 = vsel %vm1011, 1, 0
        %v1084 = vsel %vm1012, 1, 0
        %v1085 = vsel %vm1013, 1, 0
        %v1086 = vsel %vm1014, 1, 0
        %v1087 = vsel %vm1015, 1, 0
        %v1088 = vsel %vm1016, 1, 0
        %v1089 = vsel %vm1017, 1, 0
        %v1090 = vsel %vm1018, 1, 0
        %v1091 = vsel %vm1019, 1, 0
        %v1092 = vsel %vm1020, 1, 0
        %v1093 = vsel %vm1021, 1, 0
        %v1094 = vsel %vm1022, 1, 0
        %v1095 = vsel %vm1023, 1, 0
        %v1096 = vsel %vm1024, 1, 0
        %v1097 = vsel %vm1025, 1, 0
        %v1098 = vsel %vm1026, 1, 0
        %v1099 = vsel %vm1027, 1, 0
        %v1100 = vsel %vm1028, 1, 0
        %v1101 = vsel %vm1029, 1, 0
        %v1102 = vsel %vm1030, 1, 0
        %v1103 = vsel %vm1031, 1, 0
        %v1104 = vsel %vm1032, 1, 0
        %v1105 = vsel %vm1033, 1, 0
        %v1106 = vsel %vm1034, 1, 0
        %v1107 = vsel %vm1035, 1, 0
        %v1108 = vsel %vm1036, 1, 0
        %v1109 = vsel %vm1037, 1, 0
        %v1110 = vsel %vm1038, 1, 0
        %v1111 = vsel %vm1039, 1, 0
        %v1112 = vsel %vm1040, 1, 0
        %v1113 = vsel %vm1041, 1, 0
        %v1114 = vsel %vm1042, 1, 0
        %v1115 = vsel %vm1043, 1, 0
        %v1116 = vsel %vm1044, 1, 0
        %v1117 = vsel %vm1045, 1, 0
        %v1118 = vsel %vm1046, 1, 0
        %v1119 = vsel %vm1047, 1, 0
        %v1120 = vsel %vm1048, 1, 0
        %v1121 = vsel %vm1049, 1, 0
        %v1122 = vsel %vm1050, 1, 0
        %v1123 = vsel %vm1051, 1, 0
        %v1124 = vsel %vm1052, 1, 0
        %v1125 = vsel %vm1053, 1, 0
        %v1126 = vsel %vm1054, 1, 0
        %v1127 = vcvt.s32.f32 %v1055
        %v1128 = vcvt.s32.f32 %v1056
        %v1129 = vcvt.s32.f32 %v1057
        %v1130 = vcvt.s32.f32 %v1058
        %v1131 = vcvt.s32.f32 %v1059
        %v1132 = vcvt.s32.f32 %v1060
        %v1133 = vcvt.s32.f32 %v1061
        %v1134 = vcvt.s32.f32 %v1062
        %v1135 = vcvt.s32.f32 %v1063
        %v1136 = vcvt.s32.f32 %v1064
        %v1137 = vcvt.s32.f32 %v1065
        %v1138 = vcvt.s32.f32 %v1066
        %v1139 = vcvt.s32.f32 %v1067
        %v1140 = vcvt.s32.f32 %v1068
        %v1141 = vcvt.s32.f32 %v1069
        %v1142 = vcvt.s32.f32 %v1070
        %v1143 = vcvt.s32.f32 %v1071
        %v1144 = vcvt.s32.f32 %v1072
        %v1145 = vcvt.s32.f32 %v1073
        %v1146 = vcvt.s32.f32 %v1074
        %v1147 = vcvt.s32.f32 %v1075
        %v1148 = vcvt.s32.f32 %v1076
        %v1149 = vcvt.s32.f32 %v1077
        %v1150 = vcvt.s32.f32 %v1078
        %v1151 = vcvt.s32.f32 %v1079
        %v1152 = vcvt.s32.f32 %v1080
        %v1153 = vcvt.s32.f32 %v1081
        %v1154 = vcvt.s32.f32 %v1082
        %v1155 = vcvt.s32.f32 %v1083
        %v1156 = vcvt.s32.f32 %v1084
        %v1157 = vcvt.s32.f32 %v1085
        %v1158 = vcvt.s32.f32 %v1086
        %v1159 = vcvt.s32.f32 %v1087
        %v1160 = vcvt.s32.f32 %v1088
        %v1161 = vcvt.s32.f32 %v1089
        %v1162 = vcvt.s32.f32 %v1090
        %v1163 = vcvt.s32.f32 %v1091
        %v1164 = vcvt.s32.f32 %v1092
        %v1165 = vcvt.s32.f32 %v1093
        %v1166 = vcvt.s32.f32 %v1094
        %v1167 = vcvt.s32.f32 %v1095
        %v1168 = vcvt.s32.f32 %v1096
        %v1169 = vcvt.s32.f32 %v1097
        %v1170 = vcvt.s32.f32 %v1098
        %v1171 = vcvt.s32.f32 %v1099
        %v1172 = vcvt.s32.f32 %v1100
        %v1173 = vcvt.s32.f32 %v1101
        %v1174 = vcvt.s32.f32 %v1102
        %v1175 = vcvt.s32.f32 %v1103
        %v1176 = vcvt.s32.f32 %v1104
        %v1177 = vcvt.s32.f32 %v1105
        %v1178 = vcvt.s32.f32 %v1106
        %v1179 = vcvt.s32.f32 %v1107
        %v1180 = vcvt.s32.f32 %v1108
        %v1181 = vcvt.s32.f32 %v1109
        %v1182 = vcvt.s32.f32 %v1110
        %v1183 = vcvt.s32.f32 %v1111
        %v1184 = vcvt.s32.f32 %v1112
        %v1185 = vcvt.s32.f32 %v1113
        %v1186 = vcvt.s32.f32 %v1114
        %v1187 = vcvt.s32.f32 %v1115
        %v1188 = vcvt.s32.f32 %v1116
        %v1189 = vcvt.s32.f32 %v1117
        %v1190 = vcvt.s32.f32 %v1118
        %v1191 = vcvt.s32.f32 %v1119
        %v1192 = vcvt.s32.f32 %v1120
        %v1193 = vcvt.s32.f32 %v1121
        %v1194 = vcvt.s32.f32 %v1122
        %v1195 = vcvt.s32.f32 %v1123
        %v1196 = vcvt.s32.f32 %v1124
        %v1197 = vcvt.s32.f32 %v1125
        %v1198 = vcvt.s32.f32 %v1126
        %v1199 = vld [vmem:[%s120] sm:$0xff]
        %v1200 = vld [vmem:[%s120 + $0x8] sm:$0xff]
        %v1201 = vld [vmem:[%s120 + $0x10] sm:$0xff]
        %v1202 = vld [vmem:[%s120 + $0x18] sm:$0xff]
        %v1203 = vld [vmem:[%s120 + $0x20] sm:$0xff]
        %v1204 = vld [vmem:[%s120 + $0x28] sm:$0xff]
        %v1205 = vld [vmem:[%s120 + $0x30] sm:$0xff]
        %v1206 = vld [vmem:[%s120 + $0x38] sm:$0xff]
        %v1207 = vld [vmem:[%s120 + $0x40] sm:$0xff]
        %v1208 = vld [vmem:[%s120 + $0x48] sm:$0xff]
        %v1209 = vld [vmem:[%s120 + $0x50] sm:$0xff]
        %v1210 = vld [vmem:[%s120 + $0x58] sm:$0xff]
        %v1211 = vld [vmem:[%s120 + $0x60] sm:$0xff]
        %v1212 = vld [vmem:[%s120 + $0x68] sm:$0xff]
        %v1213 = vld [vmem:[%s120 + $0x70] sm:$0xff]
        %v1214 = vld [vmem:[%s120 + $0x78] sm:$0xff]
        %v1215 = vld [vmem:[%s120 + $0x80] sm:$0xff]
        %v1216 = vld [vmem:[%s120 + $0x88] sm:$0xff]
        %v1217 = vld [vmem:[%s120 + $0x90] sm:$0xff]
        %v1218 = vld [vmem:[%s120 + $0x98] sm:$0xff]
        %v1219 = vld [vmem:[%s120 + $0xa0] sm:$0xff]
        %v1220 = vld [vmem:[%s120 + $0xa8] sm:$0xff]
        %v1221 = vld [vmem:[%s120 + $0xb0] sm:$0xff]
        %v1222 = vld [vmem:[%s120 + $0xb8] sm:$0xff]
        %v1223 = vld [vmem:[%s120 + $0xc0] sm:$0xff]
        %v1224 = vld [vmem:[%s120 + $0xc8] sm:$0xff]
        %v1225 = vld [vmem:[%s120 + $0xd0] sm:$0xff]
        %v1226 = vld [vmem:[%s120 + $0xd8] sm:$0xff]
        %v1227 = vld [vmem:[%s120 + $0xe0] sm:$0xff]
        %v1228 = vld [vmem:[%s120 + $0xe8] sm:$0xff]
        %v1229 = vld [vmem:[%s120 + $0xf0] sm:$0xff]
        %v1230 = vld [vmem:[%s120 + $0xf8] sm:$0xff]
        %v1231 = vld [vmem:[%s120 + $0x100] sm:$0xff]
        %v1232 = vld [vmem:[%s120 + $0x108] sm:$0xff]
        %v1233 = vld [vmem:[%s120 + $0x110] sm:$0xff]
        %v1234 = vld [vmem:[%s120 + $0x118] sm:$0xff]
        %v1235 = vld [vmem:[%s120 + $0x120] sm:$0xff]
        %v1236 = vld [vmem:[%s120 + $0x128] sm:$0xff]
        %v1237 = vld [vmem:[%s120 + $0x130] sm:$0xff]
        %v1238 = vld [vmem:[%s120 + $0x138] sm:$0xff]
        %v1239 = vld [vmem:[%s120 + $0x140] sm:$0xff]
        %v1240 = vld [vmem:[%s120 + $0x148] sm:$0xff]
        %v1241 = vld [vmem:[%s120 + $0x150] sm:$0xff]
        %v1242 = vld [vmem:[%s120 + $0x158] sm:$0xff]
        %v1243 = vld [vmem:[%s120 + $0x160] sm:$0xff]
        %v1244 = vld [vmem:[%s120 + $0x168] sm:$0xff]
        %v1245 = vld [vmem:[%s120 + $0x170] sm:$0xff]
        %v1246 = vld [vmem:[%s120 + $0x178] sm:$0xff]
        %v1247 = vld [vmem:[%s120 + $0x180] sm:$0xff]
        %v1248 = vld [vmem:[%s120 + $0x188] sm:$0xff]
        %v1249 = vld [vmem:[%s120 + $0x190] sm:$0xff]
        %v1250 = vld [vmem:[%s120 + $0x198] sm:$0xff]
        %v1251 = vld [vmem:[%s120 + $0x1a0] sm:$0xff]
        %v1252 = vld [vmem:[%s120 + $0x1a8] sm:$0xff]
        %v1253 = vld [vmem:[%s120 + $0x1b0] sm:$0xff]
        %v1254 = vld [vmem:[%s120 + $0x1b8] sm:$0xff]
        %v1255 = vld [vmem:[%s120 + $0x1c0] sm:$0xff]
        %v1256 = vld [vmem:[%s120 + $0x1c8] sm:$0xff]
        %v1257 = vld [vmem:[%s120 + $0x1d0] sm:$0xff]
        %v1258 = vld [vmem:[%s120 + $0x1d8] sm:$0xff]
        %v1259 = vld [vmem:[%s120 + $0x1e0] sm:$0xff]
        %v1260 = vld [vmem:[%s120 + $0x1e8] sm:$0xff]
        %v1261 = vld [vmem:[%s120 + $0x1f0] sm:$0xff]
        %v1262 = vld [vmem:[%s120 + $0x1f8] sm:$0xff]
        %v1263 = vld [vmem:[%s120 + $0x200] sm:$0xff]
        %v1264 = vld [vmem:[%s120 + $0x208] sm:$0xff]
        %v1265 = vld [vmem:[%s120 + $0x210] sm:$0xff]
        %v1266 = vld [vmem:[%s120 + $0x218] sm:$0xff]
        %v1267 = vld [vmem:[%s120 + $0x220] sm:$0xff]
        %v1268 = vld [vmem:[%s120 + $0x228] sm:$0xff]
        %v1269 = vld [vmem:[%s120 + $0x230] sm:$0xff]
        %v1270 = vld [vmem:[%s120 + $0x238] sm:$0xff]
        %v1271 = vmul.f32 %v1127, 1.1111112
        %v1272 = vmul.f32 %v1128, 1.1111112
        %v1273 = vmul.f32 %v1129, 1.1111112
        %v1274 = vmul.f32 %v1130, 1.1111112
        %v1275 = vmul.f32 %v1131, 1.1111112
        %v1276 = vmul.f32 %v1132, 1.1111112
        %v1277 = vmul.f32 %v1133, 1.1111112
        %v1278 = vmul.f32 %v1134, 1.1111112
        %v1279 = vmul.f32 %v1135, 1.1111112
        %v1280 = vmul.f32 %v1136, 1.1111112
        %v1281 = vmul.f32 %v1137, 1.1111112
        %v1282 = vmul.f32 %v1138, 1.1111112
        %v1283 = vmul.f32 %v1139, 1.1111112
        %v1284 = vmul.f32 %v1140, 1.1111112
        %v1285 = vmul.f32 %v1141, 1.1111112
        %v1286 = vmul.f32 %v1142, 1.1111112
        %v1287 = vmul.f32 %v1143, 1.1111112
        %v1288 = vmul.f32 %v1144, 1.1111112
        %v1289 = vmul.f32 %v1145, 1.1111112
        %v1290 = vmul.f32 %v1146, 1.1111112
        %v1291 = vmul.f32 %v1147, 1.1111112
        %v1292 = vmul.f32 %v1148, 1.1111112
        %v1293 = vmul.f32 %v1149, 1.1111112
        %v1294 = vmul.f32 %v1150, 1.1111112
        %v1295 = vmul.f32 %v1151, 1.1111112
        %v1296 = vmul.f32 %v1152, 1.1111112
        %v1297 = vmul.f32 %v1153, 1.1111112
        %v1298 = vmul.f32 %v1154, 1.1111112
        %v1299 = vmul.f32 %v1155, 1.1111112
        %v1300 = vmul.f32 %v1156, 1.1111112
        %v1301 = vmul.f32 %v1157, 1.1111112
        %v1302 = vmul.f32 %v1158, 1.1111112
        %v1303 = vmul.f32 %v1159, 1.1111112
        %v1304 = vmul.f32 %v1160, 1.1111112
        %v1305 = vmul.f32 %v1161, 1.1111112
        %v1306 = vmul.f32 %v1162, 1.1111112
        %v1307 = vmul.f32 %v1163, 1.1111112
        %v1308 = vmul.f32 %v1164, 1.1111112
        %v1309 = vmul.f32 %v1165, 1.1111112
        %v1310 = vmul.f32 %v1166, 1.1111112
        %v1311 = vmul.f32 %v1167, 1.1111112
        %v1312 = vmul.f32 %v1168, 1.1111112
        %v1313 = vmul.f32 %v1169, 1.1111112
        %v1314 = vmul.f32 %v1170, 1.1111112
        %v1315 = vmul.f32 %v1171, 1.1111112
        %v1316 = vmul.f32 %v1172, 1.1111112
        %v1317 = vmul.f32 %v1173, 1.1111112
        %v1318 = vmul.f32 %v1174, 1.1111112
        %v1319 = vmul.f32 %v1175, 1.1111112
        %v1320 = vmul.f32 %v1176, 1.1111112
        %v1321 = vmul.f32 %v1177, 1.1111112
        %v1322 = vmul.f32 %v1178, 1.1111112
        %v1323 = vmul.f32 %v1179, 1.1111112
        %v1324 = vmul.f32 %v1180, 1.1111112
        %v1325 = vmul.f32 %v1181, 1.1111112
        %v1326 = vmul.f32 %v1182, 1.1111112
        %v1327 = vmul.f32 %v1183, 1.1111112
        %v1328 = vmul.f32 %v1184, 1.1111112
        %v1329 = vmul.f32 %v1185, 1.1111112
        %v1330 = vmul.f32 %v1186, 1.1111112
        %v1331 = vmul.f32 %v1187, 1.1111112
        %v1332 = vmul.f32 %v1188, 1.1111112
        %v1333 = vmul.f32 %v1189, 1.1111112
        %v1334 = vmul.f32 %v1190, 1.1111112
        %v1335 = vmul.f32 %v1191, 1.1111112
        %v1336 = vmul.f32 %v1192, 1.1111112
        %v1337 = vmul.f32 %v1193, 1.1111112
        %v1338 = vmul.f32 %v1194, 1.1111112
        %v1339 = vmul.f32 %v1195, 1.1111112
        %v1340 = vmul.f32 %v1196, 1.1111112
        %v1341 = vmul.f32 %v1197, 1.1111112
        %v1342 = vmul.f32 %v1198, 1.1111112
        %v1343 = vmul.f32 %v1199, %v1271
        %v1344 = vmul.f32 %v1200, %v1272
        %v1345 = vmul.f32 %v1201, %v1273
        %v1346 = vmul.f32 %v1202, %v1274
        %v1347 = vmul.f32 %v1203, %v1275
        %v1348 = vmul.f32 %v1204, %v1276
        %v1349 = vmul.f32 %v1205, %v1277
        %v1350 = vmul.f32 %v1206, %v1278
        %v1351 = vmul.f32 %v1207, %v1279
        %v1352 = vmul.f32 %v1208, %v1280
        %v1353 = vmul.f32 %v1209, %v1281
        %v1354 = vmul.f32 %v1210, %v1282
        %v1355 = vmul.f32 %v1211, %v1283
        %v1356 = vmul.f32 %v1212, %v1284
        %v1357 = vmul.f32 %v1213, %v1285
        %v1358 = vmul.f32 %v1214, %v1286
        %v1359 = vmul.f32 %v1215, %v1287
        %v1360 = vmul.f32 %v1216, %v1288
        %v1361 = vmul.f32 %v1217, %v1289
        %v1362 = vmul.f32 %v1218, %v1290
        %v1363 = vmul.f32 %v1219, %v1291
        %v1364 = vmul.f32 %v1220, %v1292
        %v1365 = vmul.f32 %v1221, %v1293
        %v1366 = vmul.f32 %v1222, %v1294
        %v1367 = vmul.f32 %v1223, %v1295
        %v1368 = vmul.f32 %v1224, %v1296
        %v1369 = vmul.f32 %v1225, %v1297
        %v1370 = vmul.f32 %v1226, %v1298
        %v1371 = vmul.f32 %v1227, %v1299
        %v1372 = vmul.f32 %v1228, %v1300
        %v1373 = vmul.f32 %v1229, %v1301
        %v1374 = vmul.f32 %v1230, %v1302
        %v1375 = vmul.f32 %v1231, %v1303
        %v1376 = vmul.f32 %v1232, %v1304
        %v1377 = vmul.f32 %v1233, %v1305
        %v1378 = vmul.f32 %v1234, %v1306
        %v1379 = vmul.f32 %v1235, %v1307
        %v1380 = vmul.f32 %v1236, %v1308
        %v1381 = vmul.f32 %v1237, %v1309
        %v1382 = vmul.f32 %v1238, %v1310
        %v1383 = vmul.f32 %v1239, %v1311
        %v1384 = vmul.f32 %v1240, %v1312
        %v1385 = vmul.f32 %v1241, %v1313
        %v1386 = vmul.f32 %v1242, %v1314
        %v1387 = vmul.f32 %v1243, %v1315
        %v1388 = vmul.f32 %v1244, %v1316
        %v1389 = vmul.f32 %v1245, %v1317
        %v1390 = vmul.f32 %v1246, %v1318
        %v1391 = vmul.f32 %v1247, %v1319
        %v1392 = vmul.f32 %v1248, %v1320
        %v1393 = vmul.f32 %v1249, %v1321
        %v1394 = vmul.f32 %v1250, %v1322
        %v1395 = vmul.f32 %v1251, %v1323
        %v1396 = vmul.f32 %v1252, %v1324
        %v1397 = vmul.f32 %v1253, %v1325
        %v1398 = vmul.f32 %v1254, %v1326
        %v1399 = vmul.f32 %v1255, %v1327
        %v1400 = vmul.f32 %v1256, %v1328
        %v1401 = vmul.f32 %v1257, %v1329
        %v1402 = vmul.f32 %v1258, %v1330
        %v1403 = vmul.f32 %v1259, %v1331
        %v1404 = vmul.f32 %v1260, %v1332
        %v1405 = vmul.f32 %v1261, %v1333
        %v1406 = vmul.f32 %v1262, %v1334
        %v1407 = vmul.f32 %v1263, %v1335
        %v1408 = vmul.f32 %v1264, %v1336
        %v1409 = vmul.f32 %v1265, %v1337
        %v1410 = vmul.f32 %v1266, %v1338
        %v1411 = vmul.f32 %v1267, %v1339
        %v1412 = vmul.f32 %v1268, %v1340
        %v1413 = vmul.f32 %v1269, %v1341
        %v1414 = vmul.f32 %v1270, %v1342
        %1415 = vst [vmem:[%s139] sm:$0xff] %v1343
        %1416 = vst [vmem:[%s139 + $0x8] sm:$0xff] %v1344
        %1417 = vst [vmem:[%s139 + $0x10] sm:$0xff] %v1345
        %1418 = vst [vmem:[%s139 + $0x18] sm:$0xff] %v1346
        %1419 = vst [vmem:[%s139 + $0x20] sm:$0xff] %v1347
        %1420 = vst [vmem:[%s139 + $0x28] sm:$0xff] %v1348
        %1421 = vst [vmem:[%s139 + $0x30] sm:$0xff] %v1349
        %1422 = vst [vmem:[%s139 + $0x38] sm:$0xff] %v1350
        %1423 = vst [vmem:[%s139 + $0x40] sm:$0xff] %v1351
        %1424 = vst [vmem:[%s139 + $0x48] sm:$0xff] %v1352
        %1425 = vst [vmem:[%s139 + $0x50] sm:$0xff] %v1353
        %1426 = vst [vmem:[%s139 + $0x58] sm:$0xff] %v1354
        %1427 = vst [vmem:[%s139 + $0x60] sm:$0xff] %v1355
        %1428 = vst [vmem:[%s139 + $0x68] sm:$0xff] %v1356
        %1429 = vst [vmem:[%s139 + $0x70] sm:$0xff] %v1357
        %1430 = vst [vmem:[%s139 + $0x78] sm:$0xff] %v1358
        %1431 = vst [vmem:[%s139 + $0x80] sm:$0xff] %v1359
        %1432 = vst [vmem:[%s139 + $0x88] sm:$0xff] %v1360
        %1433 = vst [vmem:[%s139 + $0x90] sm:$0xff] %v1361
        %1434 = vst [vmem:[%s139 + $0x98] sm:$0xff] %v1362
        %1435 = vst [vmem:[%s139 + $0xa0] sm:$0xff] %v1363
        %1436 = vst [vmem:[%s139 + $0xa8] sm:$0xff] %v1364
        %1437 = vst [vmem:[%s139 + $0xb0] sm:$0xff] %v1365
        %1438 = vst [vmem:[%s139 + $0xb8] sm:$0xff] %v1366
        %1439 = vst [vmem:[%s139 + $0xc0] sm:$0xff] %v1367
        %1440 = vst [vmem:[%s139 + $0xc8] sm:$0xff] %v1368
        %1441 = vst [vmem:[%s139 + $0xd0] sm:$0xff] %v1369
        %1442 = vst [vmem:[%s139 + $0xd8] sm:$0xff] %v1370
        %1443 = vst [vmem:[%s139 + $0xe0] sm:$0xff] %v1371
        %1444 = vst [vmem:[%s139 + $0xe8] sm:$0xff] %v1372
        %1445 = vst [vmem:[%s139 + $0xf0] sm:$0xff] %v1373
        %1446 = vst [vmem:[%s139 + $0xf8] sm:$0xff] %v1374
        %1447 = vst [vmem:[%s139 + $0x100] sm:$0xff] %v1375
        %1448 = vst [vmem:[%s139 + $0x108] sm:$0xff] %v1376
        %1449 = vst [vmem:[%s139 + $0x110] sm:$0xff] %v1377
        %1450 = vst [vmem:[%s139 + $0x118] sm:$0xff] %v1378
        %1451 = vst [vmem:[%s139 + $0x120] sm:$0xff] %v1379
        %1452 = vst [vmem:[%s139 + $0x128] sm:$0xff] %v1380
        %1453 = vst [vmem:[%s139 + $0x130] sm:$0xff] %v1381
        %1454 = vst [vmem:[%s139 + $0x138] sm:$0xff] %v1382
        %1455 = vst [vmem:[%s139 + $0x140] sm:$0xff] %v1383
        %1456 = vst [vmem:[%s139 + $0x148] sm:$0xff] %v1384
        %1457 = vst [vmem:[%s139 + $0x150] sm:$0xff] %v1385
        %1458 = vst [vmem:[%s139 + $0x158] sm:$0xff] %v1386
        %1459 = vst [vmem:[%s139 + $0x160] sm:$0xff] %v1387
        %1460 = vst [vmem:[%s139 + $0x168] sm:$0xff] %v1388
        %1461 = vst [vmem:[%s139 + $0x170] sm:$0xff] %v1389
        %1462 = vst [vmem:[%s139 + $0x178] sm:$0xff] %v1390
        %1463 = vst [vmem:[%s139 + $0x180] sm:$0xff] %v1391
        %1464 = vst [vmem:[%s139 + $0x188] sm:$0xff] %v1392
        %1465 = vst [vmem:[%s139 + $0x190] sm:$0xff] %v1393
        %1466 = vst [vmem:[%s139 + $0x198] sm:$0xff] %v1394
        %1467 = vst [vmem:[%s139 + $0x1a0] sm:$0xff] %v1395
        %1468 = vst [vmem:[%s139 + $0x1a8] sm:$0xff] %v1396
        %1469 = vst [vmem:[%s139 + $0x1b0] sm:$0xff] %v1397
        %1470 = vst [vmem:[%s139 + $0x1b8] sm:$0xff] %v1398
        %1471 = vst [vmem:[%s139 + $0x1c0] sm:$0xff] %v1399
        %1472 = vst [vmem:[%s139 + $0x1c8] sm:$0xff] %v1400
        %1473 = vst [vmem:[%s139 + $0x1d0] sm:$0xff] %v1401
        %1474 = vst [vmem:[%s139 + $0x1d8] sm:$0xff] %v1402
        %1475 = vst [vmem:[%s139 + $0x1e0] sm:$0xff] %v1403
        %1476 = vst [vmem:[%s139 + $0x1e8] sm:$0xff] %v1404
        %1477 = vst [vmem:[%s139 + $0x1f0] sm:$0xff] %v1405
        %1478 = vst [vmem:[%s139 + $0x1f8] sm:$0xff] %v1406
        %1479 = vst [vmem:[%s139 + $0x200] sm:$0xff] %v1407
        %1480 = vst [vmem:[%s139 + $0x208] sm:$0xff] %v1408
        %1481 = vst [vmem:[%s139 + $0x210] sm:$0xff] %v1409
        %1482 = vst [vmem:[%s139 + $0x218] sm:$0xff] %v1410
        %1483 = vst [vmem:[%s139 + $0x220] sm:$0xff] %v1411
        %1484 = vst [vmem:[%s139 + $0x228] sm:$0xff] %v1412
        %1485 = vst [vmem:[%s139 + $0x230] sm:$0xff] %v1413
        %1486 = vst [vmem:[%s139 + $0x238] sm:$0xff] %v1414
        %s1487 = sand.u32 %s54, 1
        %s1488 = scalar_lea.sflag [#allocation6], %s1487
        %s1489 = sand.u32 %s54, 1
        %s1490 = smul.addr %s1489, 576
        %s1491 = scalar_lea.vmem [#allocation7], %s1490
        // Predicated region
        $region29: #{dropout_pallas.1} parent=23 // pred_check
          %p1492 = pneg %p64
        $region30: #{dropout_pallas.1} parent=23 // pred_check_branch
          %1494 = sbr.rel (%p1492) target = $region32
        $region31: #{dropout_pallas.1} parent=23 // pred_region
          %s1495 = smul.u32 12, %s20
          %1497 = vsyncadd %s1488, 0
          %s1498 = smul.addr %s1495, 6
          %s1499 = smul.addr %s1498, 8
          %s1500 = scalar_lea.hbm %s2, %s1499
          %s1501 = sshll.u32 %s1491, 4
          %s1502 = int_to_ptr.vmem [resolvable:$true] %s1501
          %s1503 = sshll.u32 %s1500, 4
          %s1504 = int_to_ptr.hbm [resolvable:$true] %s1503
          %1509 = dma.vmem_to_hbm [thread:$0]  %s1502, 9216, %s1504, %s1488, 768, 768, 48
        $region32: #{dropout_pallas.1} parent=23 // pred_fallthru
          _
      $region24: #{dropout_pallas.1} parent=5 // pred_fallthru
        _
      %p1510 = scmp.le.s32.totalorder 2, %s15
      // Predicated region
      $region33: #{dropout_pallas.1} parent=5 // pred_check
        %p1511 = pneg %p1510
      $region34: #{dropout_pallas.1} parent=5 // pred_check_branch
        %1513 = sbr.rel (%p1511) target = $region36
      $region35: #{dropout_pallas.1} parent=5 // pred_region
        %s1514 = ssub.s32 %s15, 2
        // Predicated region
        $region37: #{dropout_pallas.1} parent=35 // pred_check
          %p1515 = pneg %p70
        $region38: #{dropout_pallas.1} parent=35 // pred_check_branch
          %1517 = sbr.rel (%p1515) target = $region40
        $region39: #{dropout_pallas.1} parent=35 // pred_region
          %s1518 = sand.u32 %s55, 1
          %s1519 = scalar_lea.sflag [#allocation6], %s1518
          %s1520 = sand.u32 %s55, 1
          %s1521 = smul.addr %s1520, 576
          %s1522 = scalar_lea.vmem [#allocation7], %s1521
          %1524 = dma.done %s1519, 9216
        $region40: #{dropout_pallas.1} parent=35 // pred_fallthru
          _
      $region36: #{dropout_pallas.1} parent=5 // pred_fallthru
        _
    $region6: #{dropout_pallas.1} parent=1 // loop_footer
      %s19 = sadd.s32 1, %s15
    $region7: #{dropout_pallas.1} parent=1 // loop_footer_branch
      %14 = sbr.rel target = $region3
    $region8: #{dropout_pallas.1} parent=1 // loop_exit
      _
    %1525 = vsyncpa [#allocation5], 1
    %s1526 = scalar_lea.sflag [#allocation5], 1
    %1527 = vsyncpa %s1526, 1
    %1528 = vsyncpa [#allocation6], 1
    %s1529 = scalar_lea.sflag [#allocation6], 1
    %1530 = vsyncpa %s1529, 1

</llo_original>
